<compile_context>
chip_gen: v7x
topology: tpu7x:2x2x1
jax: 0.10.0
libtpu: 0.0.40
codegen_flags: <defaults>
</compile_context>

<pallas_src>
import functools

import jax
import jax.numpy as jnp
from jax.experimental import pallas as pl
from jax.experimental.pallas import tpu as pltpu

LANES = 128
SUBLANES = 8


def _device_profile():
    """Trace-time (Python-level) generation-aware tile / VMEM / slice choices."""
    kind = ""
    try:
        kind = jax.devices()[0].device_kind.lower()
    except Exception:
        pass
    if "v7" in kind:
        # 4 MiB per input block -> 2 inputs x 2 buffers = 16 MiB; raise scoped VMEM
        # explicitly but stay well inside v7x's 64 MiB physical VMEM.
        return {"block_bytes": 4 << 20, "vmem_limit": 32 << 20, "slices": 2}
    if "v6" in kind:
        # 2 MiB per input block; 8 MiB double-buffered fits 32 MiB default scoped.
        return {"block_bytes": 2 << 20, "vmem_limit": None, "slices": 1}
    if "v5" in kind:
        # 16 MiB default scoped VMEM on v5e; 8 MiB double-buffered is safe.
        return {"block_bytes": 2 << 20, "vmem_limit": None, "slices": 1}
    # Unknown generation: conservative defaults.
    return {"block_bytes": 2 << 20, "vmem_limit": None, "slices": 1}


def _rmse_sumsq_kernel(x_ref, y_ref, o_ref, *, num_blocks, row_tile,
                       ragged_rows, has_clamp):
    """Accumulates sum((x - y)^2) elementwise into an (8,128) f32 block per slice."""
    i = pl.program_id(0)          # slice index     (parallel)
    k = pl.program_id(1)          # reduction step  (arbitrary)
    k_steps = pl.num_programs(1)

    @pl.when(k == 0)
    def _():
        o_ref[...] = jnp.zeros_like(o_ref)

    blk = i * k_steps + k         # global (unclamped) block index
    last_blk = num_blocks - 1

    def accum(mask_rows):
        d = x_ref[...].astype(jnp.float32) - y_ref[...].astype(jnp.float32)
        if mask_rows is not None:
            # Only emitted for the single ragged last block.
            rid = jax.lax.broadcasted_iota(jnp.int32, (row_tile, LANES), 0)
            d = jnp.where(rid < mask_rows, d, 0.0)
        # Pure VPU accumulation: fold (row_tile,128) -> (8,128) by summing whole
        # vregs (layout-trivial reshape), then add elementwise into the resident
        # output block.
        o_ref[...] += jnp.sum(
            (d * d).reshape(row_tile // SUBLANES, SUBLANES, LANES), axis=0)

    if ragged_rows == 0:
        if has_clamp:
            # Skip the duplicated clamped block of a short slice entirely.
            @pl.when(blk <= last_blk)
            def _():
                accum(None)
        else:
            accum(None)
    else:
        # Fast unmasked path for all full blocks...
        @pl.when(blk < last_blk)
        def _():
            accum(None)

        # ...masked path only for the single ragged last block.  Clamped
        # duplicate blocks (blk > last_blk) fall through both branches.
        @pl.when(blk == last_blk)
        def _():
            accum(ragged_rows)


def rmse_loss(x, y):
    assert x.shape == y.shape, "RMSELoss requires matching shapes"
    n = x.size

    xf = jnp.ravel(x)
    yf = jnp.ravel(y)

    itemsize = jnp.dtype(x.dtype).itemsize
    # Packed sublane tile: 8x128 for 32-bit, 16x128 for 16-bit, 32x128 for 8-bit.
    sub_pack = SUBLANES * max(1, 4 // itemsize)
    chunk = sub_pack * LANES

    aligned = (n // chunk) * chunk
    tail = n - aligned

    # Tiny unaligned tail (< chunk elements): plain-JAX sum of squares.  Avoids a
    # full-array pad copy (which would double HBM traffic for this mem-bound op).
    tail_sumsq = jnp.float32(0.0)
    if tail:
        dt = xf[aligned:].astype(jnp.float32) - yf[aligned:].astype(jnp.float32)
        tail_sumsq = jnp.sum(dt * dt)

    if aligned == 0:
        # Input smaller than one packed vreg tile: a kernel launch is pure overhead.
        return jnp.sqrt(tail_sumsq / jnp.float32(n))

    prof = _device_profile()
    rows = aligned // LANES                         # multiple of sub_pack
    x2 = xf[:aligned].reshape(rows, LANES)
    y2 = yf[:aligned].reshape(rows, LANES)

    target_rows = max(
        sub_pack,
        (prof["block_bytes"] // (LANES * itemsize)) // sub_pack * sub_pack)
    row_tile = min(target_rows, rows)               # multiple of sub_pack

    num_blocks = pl.cdiv(rows, row_tile)
    ragged_rows = rows % row_tile                   # rows of the last partial block
    n_slices = max(1, min(prof["slices"], num_blocks))
    k_steps = pl.cdiv(num_blocks, n_slices)
    has_clamp = (n_slices * k_steps) != num_blocks  # only possible when n_slices>1

    if has_clamp:
        def in_map(i, k):
            return (jnp.minimum(i * k_steps + k, num_blocks - 1), 0)
    else:
        def in_map(i, k):
            return (i * k_steps + k, 0)

    kernel = functools.partial(
        _rmse_sumsq_kernel,
        num_blocks=num_blocks, row_tile=row_tile,
        ragged_rows=ragged_rows, has_clamp=has_clamp)

    in_bytes = 2 * aligned * itemsize
    out_bytes = n_slices * SUBLANES * LANES * 4

    partial = pl.pallas_call(
        kernel,
        out_shape=jax.ShapeDtypeStruct((n_slices * SUBLANES, LANES), jnp.float32),
        grid_spec=pltpu.PrefetchScalarGridSpec(
            num_scalar_prefetch=0,
            grid=(n_slices, k_steps),
            in_specs=[
                pl.BlockSpec((row_tile, LANES), in_map),
                pl.BlockSpec((row_tile, LANES), in_map),
            ],
            out_specs=pl.BlockSpec((SUBLANES, LANES), lambda i, k: (i, 0)),
        ),
        compiler_params=pltpu.CompilerParams(
            dimension_semantics=("parallel", "arbitrary"),
            vmem_limit_bytes=prof["vmem_limit"],
        ),
        cost_estimate=pl.CostEstimate(
            flops=3 * aligned,
            transcendentals=0,
            bytes_accessed=in_bytes + out_bytes,
        ),
    )(x2, y2)

    # Tiny scalar epilogue: reduce the per-slice partial sums, add tail, mean, sqrt.
    total = jnp.sum(partial) + tail_sumsq
    return jnp.sqrt(total / jnp.float32(n))


if __name__ == "__main__":
    key = jax.random.PRNGKey(0)
    kx, ky = jax.random.split(key)

    rmse = jax.jit(rmse_loss)

    # Small NCHW prediction/target pair (matches the module's usage).
    x = jax.random.normal(kx, (2, 4, 16, 16), dtype=jnp.float32)
    y = jax.random.normal(ky, (2, 4, 16, 16), dtype=jnp.float32)
    loss = rmse(x, y)
    jax.block_until_ready(loss)
    ref = jnp.sqrt(jnp.mean((x - y) ** 2))
    assert jnp.allclose(loss, ref, rtol=1e-5, atol=1e-6), (loss, ref)

    # Non-aligned element count: exercises the plain-JAX tail / small-input path.
    k1, k2 = jax.random.split(ky)
    a = jax.random.normal(k1, (3, 5, 7), dtype=jnp.float32)   # 105 elements
    b = jax.random.normal(k2, (3, 5, 7), dtype=jnp.float32)
    loss2 = rmse(a, b)
    jax.block_until_ready(loss2)
    ref2 = jnp.sqrt(jnp.mean((a - b) ** 2))
    assert jnp.allclose(loss2, ref2, rtol=1e-5, atol=1e-6), (loss2, ref2)

    # Multi-block path with a ragged last block AND an unaligned tail.
    k3, k4 = jax.random.split(k1)
    c = jax.random.normal(k3, (2, 3, 300, 301), dtype=jnp.float32)
    d = jax.random.normal(k4, (2, 3, 300, 301), dtype=jnp.float32)
    loss3 = rmse(c, d)
    jax.block_until_ready(loss3)
    ref3 = jnp.sqrt(jnp.mean((c - d) ** 2))
    assert jnp.allclose(loss3, ref3, rtol=1e-4, atol=1e-6), (loss3, ref3)

    # Sub-32-bit dtype path (packed 16x128 alignment for bf16).
    k5, k6 = jax.random.split(k3)
    e = jax.random.normal(k5, (2, 4, 16, 16), dtype=jnp.bfloat16)
    f = jax.random.normal(k6, (2, 4, 16, 16), dtype=jnp.bfloat16)
    loss4 = rmse(e, f)
    jax.block_until_ready(loss4)
    ef = e.astype(jnp.float32) - f.astype(jnp.float32)
    ref4 = jnp.sqrt(jnp.mean(ef * ef))
    assert jnp.allclose(loss4, ref4, rtol=1e-3, atol=1e-5), (loss4, ref4)

    print("KERNEL_OK")
</pallas_src>

<mosaic_0001>
module attributes {stable_mosaic.version = 11 : i64} {
  func.func @_rmse_sumsq_kernel(%arg0: i32, %arg1: i32, %arg2: memref<16x128xf32, #tpu.memory_space<vmem>>, %arg3: memref<16x128xf32, #tpu.memory_space<vmem>>, %arg4: memref<8x128xf32, #tpu.memory_space<vmem>>) attributes {dimension_semantics = [#tpu.dimension_semantics<parallel>, #tpu.dimension_semantics<arbitrary>], iteration_bounds = array<i64: 1, 1>, scalar_prefetch = 0 : i64, scratch_operands = 0 : i64, tpu.core_type = #tpu.core_type<tc>, window_params = [{transform_indices = @transform_0, window_bounds = array<i64: 16, 128>}, {transform_indices = @transform_1, window_bounds = array<i64: 16, 128>}, {transform_indices = @transform_2, window_bounds = array<i64: 8, 128>}]} {
    %c0_i32 = arith.constant 0 : i32
    %0 = arith.cmpi eq, %arg1, %c0_i32 : i32
    %1 = arith.extui %0 : i1 to i32
    %c0_i32_0 = arith.constant 0 : i32
    %2 = arith.cmpi ne, %1, %c0_i32_0 : i32
    scf.if %2 {
      %cst_8 = arith.constant 0.000000e+00 : f32
      %12 = vector.broadcast %cst_8 : f32 to vector<8x128xf32>
      %c0_9 = arith.constant 0 : index
      %c0_10 = arith.constant 0 : index
      %13 = vector.load %arg4[%c0_9, %c0_10] : memref<8x128xf32, #tpu.memory_space<vmem>>, vector<8x128xf32>
      tpu.vector_store %arg4[%c0_9, %c0_10], %12 {strides = array<i32>} : memref<8x128xf32, #tpu.memory_space<vmem>>, vector<8x128xf32>,
    } else {
    }
    %c0 = arith.constant 0 : index
    %c0_1 = arith.constant 0 : index
    %3 = vector.load %arg2[%c0, %c0_1] : memref<16x128xf32, #tpu.memory_space<vmem>>, vector<16x128xf32>
    %c0_2 = arith.constant 0 : index
    %c0_3 = arith.constant 0 : index
    %4 = vector.load %arg3[%c0_2, %c0_3] : memref<16x128xf32, #tpu.memory_space<vmem>>, vector<16x128xf32>
    %5 = arith.subf %3, %4 : vector<16x128xf32>
    %c0_4 = arith.constant 0 : index
    %c0_5 = arith.constant 0 : index
    %6 = vector.load %arg4[%c0_4, %c0_5] : memref<8x128xf32, #tpu.memory_space<vmem>>, vector<8x128xf32>
    %7 = arith.mulf %5, %5 : vector<16x128xf32>
    %8 = vector.shape_cast %7 : vector<16x128xf32> to vector<2x8x128xf32>
    %cst = arith.constant dense<0.000000e+00> : vector<8x128xf32>
    %9 = vector.multi_reduction <add>, %8, %cst [0] : vector<2x8x128xf32> to vector<8x128xf32>
    %10 = arith.addf %6, %9 : vector<8x128xf32>
    %c0_6 = arith.constant 0 : index
    %c0_7 = arith.constant 0 : index
    %11 = vector.load %arg4[%c0_6, %c0_7] : memref<8x128xf32, #tpu.memory_space<vmem>>, vector<8x128xf32>
    tpu.vector_store %arg4[%c0_6, %c0_7], %10 {strides = array<i32>} : memref<8x128xf32, #tpu.memory_space<vmem>>, vector<8x128xf32>,
    return
  }
  func.func @transform_0(%arg0: i32, %arg1: i32) -> (i32, i32) {
    %c1_i32 = arith.constant 1 : i32
    %0 = arith.muli %arg0, %c1_i32 : i32
    %1 = arith.addi %0, %arg1 : i32
    %c0_i32 = arith.constant 0 : i32
    %c0_i32_0 = arith.constant 0 : i32
    return %1, %c0_i32 : i32, i32
  }
  func.func @transform_1(%arg0: i32, %arg1: i32) -> (i32, i32) {
    %c1_i32 = arith.constant 1 : i32
    %0 = arith.muli %arg0, %c1_i32 : i32
    %1 = arith.addi %0, %arg1 : i32
    %c0_i32 = arith.constant 0 : i32
    %c0_i32_0 = arith.constant 0 : i32
    return %1, %c0_i32 : i32, i32
  }
  func.func @transform_2(%arg0: i32, %arg1: i32) -> (i32, i32) {
    %c0_i32 = arith.constant 0 : i32
    %c0_i32_0 = arith.constant 0 : i32
    return %arg0, %c0_i32 : i32, i32
  }
}

</mosaic_0001>

<llo_original>
// kernel: rmse_loss.1
$region0: #{rmse_loss.1}
  #allocation0 [shape = 'u32[]', space=smem, size = 0x4, offset = 0x4, fixed_abs, tag = 'smem constant byte address 0x4 - core index']
  #allocation1 [shape = 'u32[144,128]{1,0:T(1,128)}', space=vmem, size = 0x12000, scoped, tag = 'internal scratch']
  %s0 = inlined_call_operand.vmem [shape: f32[16,128], index: 0, kind: input, shape index: {}]
  %s1 = inlined_call_operand.vmem [shape: f32[16,128], index: 1, kind: input, shape index: {}]
  %s2 = inlined_call_operand.vmem [shape: f32[8,128], index: 2, kind: output, shape index: {}]
  %s3 = sld [smem:[#allocation0]]
  $region22: #{rmse_loss.1} parent=0
    _
  %s5 = ssub.s32 1, %s3
  %s6 = scalar_select 0, %s5, %s3
  // Predicated region
  $region2: #{rmse_loss.1} parent=0 // pred_check
    _
  $region3: #{rmse_loss.1} parent=0 // pred_check_branch
    %8 = sbr.rel (0) target = $region5
  $region4: #{rmse_loss.1} parent=0 // pred_region
    %s9 = sadd.s32 0, 0
    %s10 = smul.u32 2, %s9
    %p11 = scmp.lt.s32.totalorder %s10, 1
    %s12 = scalar_select %p11, %s10, 1
    %s13 = smul.addr %s12, 8
    %s14 = scalar_lea.vmem %s0, %s13
    %s15 = sadd.s32 0, 0
    %s16 = smul.u32 2, %s15
  $region5: #{rmse_loss.1} parent=0 // pred_fallthru
    _
  // Predicated region
  $region6: #{rmse_loss.1} parent=0 // pred_check
    _
  $region7: #{rmse_loss.1} parent=0 // pred_check_branch
    %18 = sbr.rel (0) target = $region9
  $region8: #{rmse_loss.1} parent=0 // pred_region
    %s19 = sadd.s32 0, 0
    %s20 = smul.u32 2, %s19
    %p21 = scmp.lt.s32.totalorder %s20, 1
    %s22 = scalar_select %p21, %s20, 1
    %s23 = smul.addr %s22, 8
    %s24 = scalar_lea.vmem %s1, %s23
    %s25 = sadd.s32 0, 0
    %s26 = smul.u32 2, %s25
  $region9: #{rmse_loss.1} parent=0 // pred_fallthru
    _
  %s27 = sadd.s32 0, 0
  %s28 = smul.u32 2, %s27
  %p29 = scmp.lt.s32.totalorder %s28, 1
  %s30 = scalar_select %p29, %s28, 1
  %s31 = smul.addr %s30, 8
  %s32 = scalar_lea.vmem %s0, %s31
  %s33 = sadd.s32 0, 0
  %s34 = smul.u32 2, %s33
  %p35 = scmp.lt.s32.totalorder %s34, 1
  %s36 = scalar_select %p35, %s34, 1
  %s37 = smul.addr %s36, 8
  %s38 = scalar_lea.vmem %s1, %s37
  %s39 = sadd.s32 0, 0
  %s40 = smul.u32 2, %s39
  %p41 = scmp.lt.s32.totalorder %s40, 1
  %s42 = scalar_select %p41, %s40, 1
  %s43 = smul.addr %s42, 8
  %s44 = scalar_lea.vmem %s0, %s43
  %s45 = sadd.s32 0, 0
  %s46 = smul.u32 2, %s45
  %s47 = sadd.s32 0, 0
  %s48 = smul.u32 2, %s47
  %p49 = scmp.lt.s32.totalorder %s48, 1
  %s50 = scalar_select %p49, %s48, 1
  %s51 = smul.addr %s50, 8
  %s52 = scalar_lea.vmem %s1, %s51
  %s53 = sadd.s32 0, 0
  %s54 = smul.u32 2, %s53
  %p55 = scmp.eq.s32.totalorder 0, 0
  // Predicated region
  $region10: #{rmse_loss.1} parent=0 // pred_check
    %p56 = pneg %p55
  $region11: #{rmse_loss.1} parent=0 // pred_check_branch
    %58 = sbr.rel (%p56) target = $region13
  $region12: #{rmse_loss.1} parent=0 // pred_region
    %59 = vst [vmem:[%s2] sm:$0xff] 0.0
  $region13: #{rmse_loss.1} parent=0 // pred_fallthru
    _
  %v60 = vld [vmem:[%s44] sm:$0xff]
  %v61 = vld [vmem:[%s44 + $0x8] sm:$0xff]
  %v62 = vld [vmem:[%s52] sm:$0xff]
  %v63 = vld [vmem:[%s52 + $0x8] sm:$0xff]
  %v64 = vsub.f32 %v60, %v62
  %v65 = vsub.f32 %v61, %v63
  %v66 = vld [vmem:[%s2] sm:$0xff]
  %v67 = vmul.f32 %v64, %v64
  %v68 = vmul.f32 %v65, %v65
  %v69 = vadd.f32 %v67, %v68
  %v70 = vadd.f32 %v66, %v69
  %71 = vst [vmem:[%s2] sm:$0xff] %v70
  // Predicated region
  $region14: #{rmse_loss.1} parent=0 // pred_check
    _
  $region15: #{rmse_loss.1} parent=0 // pred_check_branch
    %73 = sbr.rel (0) target = $region17
  $region16: #{rmse_loss.1} parent=0 // pred_region
    _
  $region17: #{rmse_loss.1} parent=0 // pred_fallthru
    _
  // Predicated region
  $region18: #{rmse_loss.1} parent=0 // pred_check
    _
  $region19: #{rmse_loss.1} parent=0 // pred_check_branch
    %75 = sbr.rel (0) target = $region21
  $region20: #{rmse_loss.1} parent=0 // pred_region
    _
  $region21: #{rmse_loss.1} parent=0 // pred_fallthru
    _

</llo_original>
